<compile_context>
chip_gen: v7x
topology: tpu7x:2x2x1
jax: 0.10.0
libtpu: 0.0.40
codegen_flags: <defaults>
</compile_context>

<pallas_src>
import jax
import jax.numpy as jnp
from jax.experimental import pallas as pl
from jax.experimental.pallas import tpu as pltpu


def _round_up(x, m):
    return (x + m - 1) // m * m


def attn_fusion_kernel(h1_ref, h2_ref, w1a_ref, w1b_ref, b1_ref, gate_ref,
                       b2_ref, out_ref):
    # h1_ref / h2_ref / out_ref : (T, DP)  f32   (DP = pack*D, lane-dense 128)
    # w1a_ref / w1b_ref         : (DP, HP) bf16  (block-diagonal W1 halves)
    # b1_ref                    : (1, HP)  f32
    # gate_ref                  : (HP, DP) bf16  (block-diag softmax-fold gate)
    # b2_ref                    : (1,)     f32   (SMEM scalar)
    h1 = h1_ref[...]
    h2 = h2_ref[...]

    # hidden = relu(cat([h1, h2]) @ W1 + b1): concat folded into a split matmul,
    # row-packing folded into block-diagonal weights (K = DP = 128, bf16 MXU).
    hid = jnp.dot(h1.astype(jnp.bfloat16), w1a_ref[...],
                  preferred_element_type=jnp.float32)
    hid = hid + jnp.dot(h2.astype(jnp.bfloat16), w1b_ref[...],
                        preferred_element_type=jnp.float32)
    hid = jnp.maximum(hid + b1_ref[...], 0.0)              # (T, HP) f32

    # 2-class softmax == sigmoid(logit0 - logit1).  The block-diagonal gate
    # matrix yields each packed row's logit replicated across its D lanes, i.e.
    # already in the exact layout the blend needs.
    logit = jnp.dot(hid.astype(jnp.bfloat16), gate_ref[...],
                    preferred_element_type=jnp.float32) + b2_ref[0]
    a0 = jax.nn.sigmoid(logit)                              # (T, DP)

    # out = a0 * h1 + (1 - a0) * h2   (pure f32 VPU blend, lane-dense store)
    out_ref[...] = h2 + a0 * (h1 - h2)


def attn_fusion(h1, h2, w1, b1, w2, b2, *, tile_rows=2048):
    """h1, h2: (N, D) f32.
    w1: (2D, H) pre-transposed in_proj weight, b1: (H,)
    w2: (H, 2) pre-transposed out_proj weight, b2: (2,)
    Returns (N, D) f32."""
    n, d = h1.shape
    dh = w1.shape[1]

    # Lane-dense packing: fold `pack` consecutive rows into one 128-lane row.
    pack = 128 // d if (d < 128 and 128 % d == 0) else 1
    dp = pack * d
    hp = pack * dh

    n_pad = _round_up(n, pack)
    if n_pad != n:
        h1 = jnp.pad(h1, ((0, n_pad - n), (0, 0)))
        h2 = jnp.pad(h2, ((0, n_pad - n), (0, 0)))
    np_rows = n_pad // pack
    h1p = h1.reshape(np_rows, dp)                           # zero-copy reshape
    h2p = h2.reshape(np_rows, dp)

    # Weight prep (done once, outside the kernel):
    # concat fold + row packing -> block-diagonal bf16 W1 halves.
    eye = jnp.eye(pack, dtype=w1.dtype)
    w1a_blk = jnp.kron(eye, w1[:d]).astype(jnp.bfloat16)    # (DP, HP)
    w1b_blk = jnp.kron(eye, w1[d:]).astype(jnp.bfloat16)    # (DP, HP)
    b1_tiled = jnp.tile(b1.reshape(1, dh), (1, pack))       # (1, HP) f32
    # softmax fold: per-row logit difference, broadcast across that row's lanes.
    w2diff = w2[:, 0] - w2[:, 1]                            # (H,)
    gate_blk = jnp.kron(eye, jnp.broadcast_to(w2diff[:, None], (dh, d)))
    gate_blk = gate_blk.astype(jnp.bfloat16)                # (HP, DP)
    b2diff = (b2[0] - b2[1]).reshape(1).astype(jnp.float32)  # (1,) -> SMEM

    # Row tile: large (amortize ~0.35us/step), multiple of 8, but keep >= ~4
    # grid steps when N is big enough (software pipeline + v7x two-TC sharding).
    if np_rows < 64:
        tile = np_rows                                      # full dim is legal
    else:
        tile = min(tile_rows, _round_up(-(-np_rows // 4), 8))
    grid = (-(-np_rows // tile),)

    out_p = pl.pallas_call(
        attn_fusion_kernel,
        out_shape=jax.ShapeDtypeStruct((np_rows, dp), h1.dtype),
        grid_spec=pltpu.PrefetchScalarGridSpec(
            num_scalar_prefetch=0,
            grid=grid,
            in_specs=[
                pl.BlockSpec((tile, dp), lambda i: (i, 0)),   # h1 packed tile
                pl.BlockSpec((tile, dp), lambda i: (i, 0)),   # h2 packed tile
                pl.BlockSpec((dp, hp), lambda i: (0, 0)),     # W1[:D] blockdiag (resident)
                pl.BlockSpec((dp, hp), lambda i: (0, 0)),     # W1[D:] blockdiag (resident)
                pl.BlockSpec((1, hp), lambda i: (0, 0)),      # b1 tiled          (resident)
                pl.BlockSpec((hp, dp), lambda i: (0, 0)),     # gate blockdiag    (resident)
                pl.BlockSpec(memory_space=pltpu.MemorySpace.SMEM),  # b2 diff scalar
            ],
            out_specs=pl.BlockSpec((tile, dp), lambda i: (i, 0)),
        ),
        compiler_params=pltpu.CompilerParams(
            dimension_semantics=("parallel",),
            vmem_limit_bytes=48 * 1024 * 1024,
        ),
    )(h1p, h2p, w1a_blk, w1b_blk, b1_tiled, gate_blk, b2diff)

    out = out_p.reshape(n_pad, d)
    return out[:n] if n_pad != n else out


def reference(h1, h2, w1, b1, w2, b2):
    h = jnp.concatenate([h1, h2], axis=-1)
    hidden = jax.nn.relu(h @ w1 + b1)
    logits = hidden @ w2 + b2
    attn = jax.nn.softmax(logits, axis=-1)
    return h1 * attn[:, 0:1] + h2 * attn[:, 1:2]


if __name__ == "__main__":
    # Module hyperparameters: Attn_Fusion(d_input) with MLP d_hidden_feats=128.
    d_input = 32
    d_hidden = 128
    n = 16

    key = jax.random.PRNGKey(0)
    k1, k2, k3, k4, k5, k6 = jax.random.split(key, 6)

    # Deterministic synthetic parameters (pre-transposed, JAX convention).
    w1 = jax.random.normal(k1, (2 * d_input, d_hidden), jnp.float32) * 0.1
    b1 = jax.random.normal(k2, (d_hidden,), jnp.float32) * 0.1
    w2 = jax.random.normal(k3, (d_hidden, 2), jnp.float32) * 0.1
    b2 = jax.random.normal(k4, (2,), jnp.float32) * 0.1

    # Example inputs.
    h1 = jax.random.normal(k5, (n, d_input), jnp.float32)
    h2 = jax.random.normal(k6, (n, d_input), jnp.float32)

    out = attn_fusion(h1, h2, w1, b1, w2, b2)
    out = jax.block_until_ready(out)

    ref = reference(h1, h2, w1, b1, w2, b2)
    assert out.shape == (n, d_input)
    # bf16 MXU operands for the gate MLP -> looser tolerance vs the f32 reference.
    assert jnp.allclose(out, ref, atol=2e-2, rtol=2e-2), float(
        jnp.max(jnp.abs(out - ref)))

    print("KERNEL_OK")
</pallas_src>

<mosaic_0001>
module attributes {stable_mosaic.version = 11 : i64} {
  func.func @attn_fusion_kernel(%arg0: i32, %arg1: memref<4x128xf32, #tpu.memory_space<vmem>>, %arg2: memref<4x128xf32, #tpu.memory_space<vmem>>, %arg3: memref<128x512xbf16, #tpu.memory_space<vmem>>, %arg4: memref<128x512xbf16, #tpu.memory_space<vmem>>, %arg5: memref<1x512xf32, #tpu.memory_space<vmem>>, %arg6: memref<512x128xbf16, #tpu.memory_space<vmem>>, %arg7: memref<1xf32, #tpu.memory_space<smem>>, %arg8: memref<4x128xf32, #tpu.memory_space<vmem>>) attributes {dimension_semantics = [#tpu.dimension_semantics<parallel>], iteration_bounds = array<i64: 1>, scalar_prefetch = 0 : i64, scratch_operands = 0 : i64, tpu.core_type = #tpu.core_type<tc>, window_params = [{transform_indices = @transform_0, window_bounds = array<i64: 4, 128>}, {transform_indices = @transform_1, window_bounds = array<i64: 4, 128>}, {pipeline_mode = #tpu.pipeline_mode<synchronous>, transform_indices = @transform_2, window_bounds = array<i64: 128, 512>}, {pipeline_mode = #tpu.pipeline_mode<synchronous>, transform_indices = @transform_3, window_bounds = array<i64: 128, 512>}, {pipeline_mode = #tpu.pipeline_mode<synchronous>, transform_indices = @transform_4, window_bounds = array<i64: 1, 512>}, {pipeline_mode = #tpu.pipeline_mode<synchronous>, transform_indices = @transform_5, window_bounds = array<i64: 512, 128>}, {transform_indices = @transform_6, window_bounds = array<i64: 1>}, {transform_indices = @transform_7, window_bounds = array<i64: 4, 128>}]} {
    %c0 = arith.constant 0 : index
    %c0_0 = arith.constant 0 : index
    %0 = vector.load %arg1[%c0, %c0_0] : memref<4x128xf32, #tpu.memory_space<vmem>>, vector<4x128xf32>
    %c0_1 = arith.constant 0 : index
    %c0_2 = arith.constant 0 : index
    %1 = vector.load %arg2[%c0_1, %c0_2] : memref<4x128xf32, #tpu.memory_space<vmem>>, vector<4x128xf32>
    %2 = arith.truncf %0 : vector<4x128xf32> to vector<4x128xbf16>
    %c0_3 = arith.constant 0 : index
    %c0_4 = arith.constant 0 : index
    %3 = vector.load %arg3[%c0_3, %c0_4] : memref<128x512xbf16, #tpu.memory_space<vmem>>, vector<128x512xbf16>
    %cst = arith.constant dense<0.000000e+00> : vector<4x512xf32>
    %4 = tpu.matmul %2, %3, %cst {dimension_numbers = #tpu.dot_dimension_numbers<[1], [0], [0], [1], [0, 0, 1, 1], [], []>} : vector<4x128xbf16>, vector<128x512xbf16>, vector<4x512xf32> -> vector<4x512xf32>
    %5 = arith.truncf %1 : vector<4x128xf32> to vector<4x128xbf16>
    %c0_5 = arith.constant 0 : index
    %c0_6 = arith.constant 0 : index
    %6 = vector.load %arg4[%c0_5, %c0_6] : memref<128x512xbf16, #tpu.memory_space<vmem>>, vector<128x512xbf16>
    %cst_7 = arith.constant dense<0.000000e+00> : vector<4x512xf32>
    %7 = tpu.matmul %5, %6, %cst_7 {dimension_numbers = #tpu.dot_dimension_numbers<[1], [0], [0], [1], [0, 0, 1, 1], [], []>} : vector<4x128xbf16>, vector<128x512xbf16>, vector<4x512xf32> -> vector<4x512xf32>
    %8 = arith.addf %4, %7 : vector<4x512xf32>
    %c0_8 = arith.constant 0 : index
    %c0_9 = arith.constant 0 : index
    %9 = vector.load %arg5[%c0_8, %c0_9] : memref<1x512xf32, #tpu.memory_space<vmem>>, vector<1x512xf32>
    %10 = vector.broadcast %9 : vector<1x512xf32> to vector<4x512xf32>
    %11 = arith.addf %8, %10 : vector<4x512xf32>
    %cst_10 = arith.constant 0.000000e+00 : f32
    %12 = vector.broadcast %cst_10 : f32 to vector<4x512xf32>
    %13 = arith.maximumf %11, %12 : vector<4x512xf32>
    %14 = arith.truncf %13 : vector<4x512xf32> to vector<4x512xbf16>
    %c0_11 = arith.constant 0 : index
    %c0_12 = arith.constant 0 : index
    %15 = vector.load %arg6[%c0_11, %c0_12] : memref<512x128xbf16, #tpu.memory_space<vmem>>, vector<512x128xbf16>
    %cst_13 = arith.constant dense<0.000000e+00> : vector<4x128xf32>
    %16 = tpu.matmul %14, %15, %cst_13 {dimension_numbers = #tpu.dot_dimension_numbers<[1], [0], [0], [1], [0, 0, 1, 1], [], []>} : vector<4x512xbf16>, vector<512x128xbf16>, vector<4x128xf32> -> vector<4x128xf32>
    %c0_14 = arith.constant 0 : index
    %17 = memref.load %arg7[%c0_14] : memref<1xf32, #tpu.memory_space<smem>>
    %18 = vector.broadcast %17 : f32 to vector<4x128xf32>
    %19 = arith.addf %16, %18 : vector<4x128xf32>
    %20 = arith.negf %19 : vector<4x128xf32>
    %21 = math.exp %20 : vector<4x128xf32>
    %cst_15 = arith.constant 1.000000e+00 : f32
    %22 = vector.broadcast %cst_15 : f32 to vector<4x128xf32>
    %23 = arith.addf %22, %21 : vector<4x128xf32>
    %24 = arith.divf %22, %23 : vector<4x128xf32>
    %25 = arith.subf %0, %1 : vector<4x128xf32>
    %26 = arith.mulf %24, %25 : vector<4x128xf32>
    %27 = arith.addf %1, %26 : vector<4x128xf32>
    %c0_16 = arith.constant 0 : index
    %c0_17 = arith.constant 0 : index
    %28 = vector.load %arg8[%c0_16, %c0_17] : memref<4x128xf32, #tpu.memory_space<vmem>>, vector<4x128xf32>
    tpu.vector_store %arg8[%c0_16, %c0_17], %27 {strides = array<i32>} : memref<4x128xf32, #tpu.memory_space<vmem>>, vector<4x128xf32>,
    return
  }
  func.func @transform_0(%arg0: i32) -> (i32, i32) {
    %c0_i32 = arith.constant 0 : i32
    %c0_i32_0 = arith.constant 0 : i32
    return %arg0, %c0_i32 : i32, i32
  }
  func.func @transform_1(%arg0: i32) -> (i32, i32) {
    %c0_i32 = arith.constant 0 : i32
    %c0_i32_0 = arith.constant 0 : i32
    return %arg0, %c0_i32 : i32, i32
  }
  func.func @transform_2(%arg0: i32) -> (i32, i32) {
    %c0_i32 = arith.constant 0 : i32
    %c0_i32_0 = arith.constant 0 : i32
    %c0_i32_1 = arith.constant 0 : i32
    return %c0_i32, %c0_i32_0 : i32, i32
  }
  func.func @transform_3(%arg0: i32) -> (i32, i32) {
    %c0_i32 = arith.constant 0 : i32
    %c0_i32_0 = arith.constant 0 : i32
    %c0_i32_1 = arith.constant 0 : i32
    return %c0_i32, %c0_i32_0 : i32, i32
  }
  func.func @transform_4(%arg0: i32) -> (i32, i32) {
    %c0_i32 = arith.constant 0 : i32
    %c0_i32_0 = arith.constant 0 : i32
    %c0_i32_1 = arith.constant 0 : i32
    return %c0_i32, %c0_i32_0 : i32, i32
  }
  func.func @transform_5(%arg0: i32) -> (i32, i32) {
    %c0_i32 = arith.constant 0 : i32
    %c0_i32_0 = arith.constant 0 : i32
    %c0_i32_1 = arith.constant 0 : i32
    return %c0_i32, %c0_i32_0 : i32, i32
  }
  func.func @transform_6(%arg0: i32) -> i32 {
    %c0_i32 = arith.constant 0 : i32
    %c0_i32_0 = arith.constant 0 : i32
    return %c0_i32 : i32
  }
  func.func @transform_7(%arg0: i32) -> (i32, i32) {
    %c0_i32 = arith.constant 0 : i32
    %c0_i32_0 = arith.constant 0 : i32
    return %arg0, %c0_i32 : i32, i32
  }
}

</mosaic_0001>

<llo_original>
// kernel: tpu_custom_call.1
$region0: #{tpu_custom_call.1}
  #allocation0 [shape = 'u32[]', space=smem, size = 0x4, offset = 0x4, fixed_abs, tag = 'smem constant byte address 0x4 - core index']
  #allocation1 [shape = 'u32[144,128]{1,0:T(1,128)}', space=vmem, size = 0x12000, scoped, tag = 'internal scratch']
  #allocation2 [shape = 'f32[1]{0:T(128)S(6)}', space=smem, size = 0x200, scoped, tag = 'scoped memory for tpu_custom_call.1']
  %s0 = inlined_call_operand.hbm [shape: f32[4,128], index: 0, kind: input, shape index: {}]
  %s1 = inlined_call_operand.vmem [shape: f32[4,128], index: 1, kind: input, shape index: {}]
  %s2 = inlined_call_operand.hbm [shape: bf16[128,512], index: 2, kind: input, shape index: {}]
  %s3 = inlined_call_operand.hbm [shape: bf16[128,512], index: 3, kind: input, shape index: {}]
  %s4 = inlined_call_operand.vmem [shape: f32[1,512], index: 4, kind: input, shape index: {}]
  %s5 = inlined_call_operand.hbm [shape: bf16[512,128], index: 5, kind: input, shape index: {}]
  %s6 = inlined_call_operand.<no memory space> [shape: f32[1], index: 6, kind: input, shape index: {}]
  %s7 = inlined_call_operand.hbm [shape: f32[4,128], index: 7, kind: output, shape index: {}]
  %s8 = sld [smem:[#allocation0]]
  $region54: #{tpu_custom_call.1} parent=0
    _
  %s10 = ssub.s32 1, %s8
  %s11 = scalar_select 0, %s10, %s8
  %12 = sst [smem:[#allocation2]] %s6
  $region1: #{tpu_custom_call.1} parent=0
    #allocation3 [shape = 'u8[2048]{0}', space=vmem, size = 0x800, scoped, tag = 'input window, operand 0, single buffered']
    #allocation4 [shape = 's32[1]{0}', space=sflag, size = 0x4, scoped, tag = 'scoped memory for tpu_custom_call.1']
    #allocation5 [shape = 's32[1]{0}', space=sflag, size = 0x4, scoped, tag = 'scoped memory for tpu_custom_call.1']
    #allocation6 [shape = 'u8[131072]{0}', space=vmem, size = 0x20000, scoped, tag = 'input window, operand 2, single buffered']
    #allocation7 [shape = 's32[1]{0}', space=sflag, size = 0x4, scoped, tag = 'scoped memory for tpu_custom_call.1']
    #allocation8 [shape = 'u8[131072]{0}', space=vmem, size = 0x20000, scoped, tag = 'input window, operand 3, single buffered']
    #allocation9 [shape = 'u8[131072]{0}', space=vmem, size = 0x20000, scoped, tag = 'input window, operand 5, single buffered']
    #allocation10 [shape = 's32[1]{0}', space=sflag, size = 0x4, scoped, tag = 'scoped memory for tpu_custom_call.1']
    #allocation11 [shape = 'u8[2048]{0}', space=vmem, size = 0x800, scoped, tag = 'output window, operand 0, single buffered']
    %13 = vsyncpa [#allocation4], 0
    %14 = vsyncpa [#allocation7], 0
    %15 = vsyncpa [#allocation10], 0
    %16 = vsyncpa [#allocation5], 0
    // Predicated region
    $region2: #{tpu_custom_call.1} parent=1 // pred_check
      _
    $region3: #{tpu_custom_call.1} parent=1 // pred_check_branch
      %18 = sbr.rel (0) target = $region5
    $region4: #{tpu_custom_call.1} parent=1 // pred_region
      %s20 = ssub.s32 64, 64
      %21 = vsyncadd [#allocation4], %s20
      %s23 = sshll.u32 [#allocation3], 4
      %s24 = int_to_ptr.vmem [resolvable:$true] %s23
      %26 = dma.hbm_to_vmem [thread:$0]  %s0, 64, %s24, [#allocation4]
    $region5: #{tpu_custom_call.1} parent=1 // pred_fallthru
      _
    // Predicated region
    $region6: #{tpu_custom_call.1} parent=1 // pred_check
      _
    $region7: #{tpu_custom_call.1} parent=1 // pred_check_branch
      %28 = sbr.rel (0) target = $region9
    $region8: #{tpu_custom_call.1} parent=1 // pred_region
      _
    $region9: #{tpu_custom_call.1} parent=1 // pred_fallthru
      _
    // Predicated region
    $region10: #{tpu_custom_call.1} parent=1 // pred_check
      _
    $region11: #{tpu_custom_call.1} parent=1 // pred_check_branch
      %30 = sbr.rel (0) target = $region13
    $region12: #{tpu_custom_call.1} parent=1 // pred_region
      %s32 = ssub.s32 4096, 4096
      %33 = vsyncadd [#allocation7], %s32
      %s34 = sshll.u32 [#allocation6], 4
      %s35 = int_to_ptr.vmem [resolvable:$true] %s34
      %40 = dma.hbm_to_vmem [thread:$0]  %s2, 4096, %s35, [#allocation7], 256, 256, 16
    $region13: #{tpu_custom_call.1} parent=1 // pred_fallthru
      _
    // Predicated region
    $region14: #{tpu_custom_call.1} parent=1 // pred_check
      _
    $region15: #{tpu_custom_call.1} parent=1 // pred_check_branch
      %42 = sbr.rel (0) target = $region17
    $region16: #{tpu_custom_call.1} parent=1 // pred_region
      %s44 = ssub.s32 4096, 4096
      %45 = vsyncadd [#allocation7], %s44
      %s46 = sshll.u32 [#allocation8], 4
      %s47 = int_to_ptr.vmem [resolvable:$true] %s46
      %52 = dma.hbm_to_vmem [thread:$0]  %s3, 4096, %s47, [#allocation7], 256, 256, 16
    $region17: #{tpu_custom_call.1} parent=1 // pred_fallthru
      _
    // Predicated region
    $region18: #{tpu_custom_call.1} parent=1 // pred_check
      _
    $region19: #{tpu_custom_call.1} parent=1 // pred_check_branch
      %54 = sbr.rel (0) target = $region21
    $region20: #{tpu_custom_call.1} parent=1 // pred_region
      _
    $region21: #{tpu_custom_call.1} parent=1 // pred_fallthru
      _
    // Predicated region
    $region22: #{tpu_custom_call.1} parent=1 // pred_check
      _
    $region23: #{tpu_custom_call.1} parent=1 // pred_check_branch
      %56 = sbr.rel (0) target = $region25
    $region24: #{tpu_custom_call.1} parent=1 // pred_region
      %s58 = ssub.s32 4096, 4096
      %59 = vsyncadd [#allocation10], %s58
      %s60 = sshll.u32 [#allocation9], 4
      %s61 = int_to_ptr.vmem [resolvable:$true] %s60
      %66 = dma.hbm_to_vmem [thread:$0]  %s5, 4096, %s61, [#allocation10], 64, 64, 4
    $region25: #{tpu_custom_call.1} parent=1 // pred_fallthru
      _
    // Predicated region
    $region26: #{tpu_custom_call.1} parent=1 // pred_check
      _
    $region27: #{tpu_custom_call.1} parent=1 // pred_check_branch
      %68 = sbr.rel (0) target = $region29
    $region28: #{tpu_custom_call.1} parent=1 // pred_region
      _
    $region29: #{tpu_custom_call.1} parent=1 // pred_fallthru
      _
    // Predicated region
    $region30: #{tpu_custom_call.1} parent=1 // pred_check
      _
    $region31: #{tpu_custom_call.1} parent=1 // pred_check_branch
      %70 = sbr.rel (0) target = $region33
    $region32: #{tpu_custom_call.1} parent=1 // pred_region
      %71 = dma.done [#allocation4], 64
    $region33: #{tpu_custom_call.1} parent=1 // pred_fallthru
      _
    // Predicated region
    $region34: #{tpu_custom_call.1} parent=1 // pred_check
      _
    $region35: #{tpu_custom_call.1} parent=1 // pred_check_branch
      %73 = sbr.rel (0) target = $region37
    $region36: #{tpu_custom_call.1} parent=1 // pred_region
      %74 = dma.done [#allocation7], 4096
    $region37: #{tpu_custom_call.1} parent=1 // pred_fallthru
      _
    // Predicated region
    $region38: #{tpu_custom_call.1} parent=1 // pred_check
      _
    $region39: #{tpu_custom_call.1} parent=1 // pred_check_branch
      %76 = sbr.rel (0) target = $region41
    $region40: #{tpu_custom_call.1} parent=1 // pred_region
      %77 = dma.done [#allocation7], 4096
    $region41: #{tpu_custom_call.1} parent=1 // pred_fallthru
      _
    // Predicated region
    $region42: #{tpu_custom_call.1} parent=1 // pred_check
      _
    $region43: #{tpu_custom_call.1} parent=1 // pred_check_branch
      %79 = sbr.rel (0) target = $region45
    $region44: #{tpu_custom_call.1} parent=1 // pred_region
      %80 = dma.done [#allocation10], 4096
    $region45: #{tpu_custom_call.1} parent=1 // pred_fallthru
      _
    %v82 = vld [vmem:[#allocation3] sm:$0xf]
    %v83 = vld [vmem:[%s1] sm:$0xf]
    %v84 = vpack.c.bf16 %v82, %v82
    %v85 = vld [vmem:[#allocation6] sm:$0xff]
    %v86 = vld [vmem:[#allocation6 + $0x8] sm:$0xff]
    %v87 = vld [vmem:[#allocation6 + $0x10] sm:$0xff]
    %v88 = vld [vmem:[#allocation6 + $0x18] sm:$0xff]
    %v89 = vld [vmem:[#allocation6 + $0x20] sm:$0xff]
    %v90 = vld [vmem:[#allocation6 + $0x28] sm:$0xff]
    %v91 = vld [vmem:[#allocation6 + $0x30] sm:$0xff]
    %v92 = vld [vmem:[#allocation6 + $0x38] sm:$0xff]
    %v93 = vld [vmem:[#allocation6 + $0x40] sm:$0xff]
    %v94 = vld [vmem:[#allocation6 + $0x48] sm:$0xff]
    %v95 = vld [vmem:[#allocation6 + $0x50] sm:$0xff]
    %v96 = vld [vmem:[#allocation6 + $0x58] sm:$0xff]
    %v97 = vld [vmem:[#allocation6 + $0x60] sm:$0xff]
    %v98 = vld [vmem:[#allocation6 + $0x68] sm:$0xff]
    %v99 = vld [vmem:[#allocation6 + $0x70] sm:$0xff]
    %v100 = vld [vmem:[#allocation6 + $0x78] sm:$0xff]
    %v101 = vld [vmem:[#allocation6 + $0x80] sm:$0xff]
    %v102 = vld [vmem:[#allocation6 + $0x88] sm:$0xff]
    %v103 = vld [vmem:[#allocation6 + $0x90] sm:$0xff]
    %v104 = vld [vmem:[#allocation6 + $0x98] sm:$0xff]
    %v105 = vld [vmem:[#allocation6 + $0xa0] sm:$0xff]
    %v106 = vld [vmem:[#allocation6 + $0xa8] sm:$0xff]
    %v107 = vld [vmem:[#allocation6 + $0xb0] sm:$0xff]
    %v108 = vld [vmem:[#allocation6 + $0xb8] sm:$0xff]
    %v109 = vld [vmem:[#allocation6 + $0xc0] sm:$0xff]
    %v110 = vld [vmem:[#allocation6 + $0xc8] sm:$0xff]
    %v111 = vld [vmem:[#allocation6 + $0xd0] sm:$0xff]
    %v112 = vld [vmem:[#allocation6 + $0xd8] sm:$0xff]
    %v113 = vld [vmem:[#allocation6 + $0xe0] sm:$0xff]
    %v114 = vld [vmem:[#allocation6 + $0xe8] sm:$0xff]
    %v115 = vld [vmem:[#allocation6 + $0xf0] sm:$0xff]
    %v116 = vld [vmem:[#allocation6 + $0xf8] sm:$0xff]
    %v117 = vpack.c.bf16 %v83, %v83
    %v118 = vld [vmem:[#allocation8] sm:$0xff]
    %v119 = vld [vmem:[#allocation8 + $0x8] sm:$0xff]
    %v120 = vld [vmem:[#allocation8 + $0x10] sm:$0xff]
    %v121 = vld [vmem:[#allocation8 + $0x18] sm:$0xff]
    %v122 = vld [vmem:[#allocation8 + $0x20] sm:$0xff]
    %v123 = vld [vmem:[#allocation8 + $0x28] sm:$0xff]
    %v124 = vld [vmem:[#allocation8 + $0x30] sm:$0xff]
    %v125 = vld [vmem:[#allocation8 + $0x38] sm:$0xff]
    %v126 = vld [vmem:[#allocation8 + $0x40] sm:$0xff]
    %v127 = vld [vmem:[#allocation8 + $0x48] sm:$0xff]
    %v128 = vld [vmem:[#allocation8 + $0x50] sm:$0xff]
    %v129 = vld [vmem:[#allocation8 + $0x58] sm:$0xff]
    %v130 = vld [vmem:[#allocation8 + $0x60] sm:$0xff]
    %v131 = vld [vmem:[#allocation8 + $0x68] sm:$0xff]
    %v132 = vld [vmem:[#allocation8 + $0x70] sm:$0xff]
    %v133 = vld [vmem:[#allocation8 + $0x78] sm:$0xff]
    %v134 = vld [vmem:[#allocation8 + $0x80] sm:$0xff]
    %v135 = vld [vmem:[#allocation8 + $0x88] sm:$0xff]
    %v136 = vld [vmem:[#allocation8 + $0x90] sm:$0xff]
    %v137 = vld [vmem:[#allocation8 + $0x98] sm:$0xff]
    %v138 = vld [vmem:[#allocation8 + $0xa0] sm:$0xff]
    %v139 = vld [vmem:[#allocation8 + $0xa8] sm:$0xff]
    %v140 = vld [vmem:[#allocation8 + $0xb0] sm:$0xff]
    %v141 = vld [vmem:[#allocation8 + $0xb8] sm:$0xff]
    %v142 = vld [vmem:[#allocation8 + $0xc0] sm:$0xff]
    %v143 = vld [vmem:[#allocation8 + $0xc8] sm:$0xff]
    %v144 = vld [vmem:[#allocation8 + $0xd0] sm:$0xff]
    %v145 = vld [vmem:[#allocation8 + $0xd8] sm:$0xff]
    %v146 = vld [vmem:[#allocation8 + $0xe0] sm:$0xff]
    %v147 = vld [vmem:[#allocation8 + $0xe8] sm:$0xff]
    %v148 = vld [vmem:[#allocation8 + $0xf0] sm:$0xff]
    %v149 = vld [vmem:[#allocation8 + $0xf8] sm:$0xff]
    %v182 = vunpack.c.l.b16 %v118
    %v183 = vunpack.c.h.b16 %v118
    %v184 = vunpack.c.l.b16 %v119
    %v185 = vunpack.c.h.b16 %v119
    %v186 = vunpack.c.l.b16 %v120
    %v187 = vunpack.c.h.b16 %v120
    %v188 = vunpack.c.l.b16 %v121
    %v189 = vunpack.c.h.b16 %v121
    %v190 = vunpack.c.l.b16 %v122
    %v191 = vunpack.c.h.b16 %v122
    %v192 = vunpack.c.l.b16 %v123
    %v193 = vunpack.c.h.b16 %v123
    %v194 = vunpack.c.l.b16 %v124
    %v195 = vunpack.c.h.b16 %v124
    %v196 = vunpack.c.l.b16 %v125
    %v197 = vunpack.c.h.b16 %v125
    %v198 = vunpack.c.l.b16 %v126
    %v199 = vunpack.c.h.b16 %v126
    %v200 = vunpack.c.l.b16 %v127
    %v201 = vunpack.c.h.b16 %v127
    %v202 = vunpack.c.l.b16 %v128
    %v203 = vunpack.c.h.b16 %v128
    %v204 = vunpack.c.l.b16 %v129
    %v205 = vunpack.c.h.b16 %v129
    %v206 = vunpack.c.l.b16 %v130
    %v207 = vunpack.c.h.b16 %v130
    %v208 = vunpack.c.l.b16 %v131
    %v209 = vunpack.c.h.b16 %v131
    %v210 = vunpack.c.l.b16 %v132
    %v211 = vunpack.c.h.b16 %v132
    %v212 = vunpack.c.l.b16 %v133
    %v213 = vunpack.c.h.b16 %v133
    %v214 = vunpack.c.l.b16 %v134
    %v215 = vunpack.c.h.b16 %v134
    %v216 = vunpack.c.l.b16 %v135
    %v217 = vunpack.c.h.b16 %v135
    %v218 = vunpack.c.l.b16 %v136
    %v219 = vunpack.c.h.b16 %v136
    %v220 = vunpack.c.l.b16 %v137
    %v221 = vunpack.c.h.b16 %v137
    %v222 = vunpack.c.l.b16 %v138
    %v223 = vunpack.c.h.b16 %v138
    %v224 = vunpack.c.l.b16 %v139
    %v225 = vunpack.c.h.b16 %v139
    %v226 = vunpack.c.l.b16 %v140
    %v227 = vunpack.c.h.b16 %v140
    %v228 = vunpack.c.l.b16 %v141
    %v229 = vunpack.c.h.b16 %v141
    %v230 = vunpack.c.l.b16 %v142
    %v231 = vunpack.c.h.b16 %v142
    %v232 = vunpack.c.l.b16 %v143
    %v233 = vunpack.c.h.b16 %v143
    %v234 = vunpack.c.l.b16 %v144
    %v235 = vunpack.c.h.b16 %v144
    %v236 = vunpack.c.l.b16 %v145
    %v237 = vunpack.c.h.b16 %v145
    %v238 = vunpack.c.l.b16 %v146
    %v239 = vunpack.c.h.b16 %v146
    %v240 = vunpack.c.l.b16 %v147
    %v241 = vunpack.c.h.b16 %v147
    %v242 = vunpack.c.l.b16 %v148
    %v243 = vunpack.c.h.b16 %v148
    %v244 = vunpack.c.l.b16 %v149
    %v245 = vunpack.c.h.b16 %v149
    %v246 = vpack.c.b16 %v186, %v182
    %v247 = vpack.c.b16 %v187, %v183
    %v248 = vpack.c.b16 %v188, %v184
    %v249 = vpack.c.b16 %v189, %v185
    %v250 = vpack.c.b16 %v194, %v190
    %v251 = vpack.c.b16 %v195, %v191
    %v252 = vpack.c.b16 %v196, %v192
    %v253 = vpack.c.b16 %v197, %v193
    %v254 = vpack.c.b16 %v202, %v198
    %v255 = vpack.c.b16 %v203, %v199
    %v256 = vpack.c.b16 %v204, %v200
    %v257 = vpack.c.b16 %v205, %v201
    %v258 = vpack.c.b16 %v210, %v206
    %v259 = vpack.c.b16 %v211, %v207
    %v260 = vpack.c.b16 %v212, %v208
    %v261 = vpack.c.b16 %v213, %v209
    %v262 = vpack.c.b16 %v218, %v214
    %v263 = vpack.c.b16 %v219, %v215
    %v264 = vpack.c.b16 %v220, %v216
    %v265 = vpack.c.b16 %v221, %v217
    %v266 = vpack.c.b16 %v226, %v222
    %v267 = vpack.c.b16 %v227, %v223
    %v268 = vpack.c.b16 %v228, %v224
    %v269 = vpack.c.b16 %v229, %v225
    %v270 = vpack.c.b16 %v234, %v230
    %v271 = vpack.c.b16 %v235, %v231
    %v272 = vpack.c.b16 %v236, %v232
    %v273 = vpack.c.b16 %v237, %v233
    %v274 = vpack.c.b16 %v242, %v238
    %v275 = vpack.c.b16 %v243, %v239
    %v276 = vpack.c.b16 %v244, %v240
    %v277 = vpack.c.b16 %v245, %v241
    %310 = vmatprep.subr.bf16.mxu0 %v247
    %311 = vmatpush1.bf16.msra.mxu0 %v246
    %312 = vmatprep.subr.bf16.mxu0 %v251
    %313 = vmatpush1.bf16.msra.mxu0 %v250
    %314 = vmatprep.subr.bf16.mxu0 %v255
    %315 = vmatpush1.bf16.msra.mxu0 %v254
    %316 = vmatprep.subr.bf16.mxu0 %v259
    %317 = vmatpush1.bf16.msra.mxu0 %v258
    %318 = vmatprep.subr.bf16.mxu0 %v263
    %319 = vmatpush1.bf16.msra.mxu0 %v262
    %320 = vmatprep.subr.bf16.mxu0 %v267
    %321 = vmatpush1.bf16.msra.mxu0 %v266
    %322 = vmatprep.subr.bf16.mxu0 %v271
    %323 = vmatpush1.bf16.msra.mxu0 %v270
    %324 = vmatprep.subr.bf16.mxu0 %v275
    %325 = vmatpush1.bf16.msra.mxu0 %v274
    %326 = vmatprep.subr.bf16.mxu0 0
    %327 = vmatpush1.bf16.msra.mxu0 0
    %328 = vmatprep.subr.bf16.mxu0 0
    %329 = vmatpush1.bf16.msra.mxu0 0
    %330 = vmatprep.subr.bf16.mxu0 0
    %331 = vmatpush1.bf16.msra.mxu0 0
    %332 = vmatprep.subr.bf16.mxu0 0
    %333 = vmatpush1.bf16.msra.mxu0 0
    %334 = vmatprep.subr.bf16.mxu0 0
    %335 = vmatpush1.bf16.msra.mxu0 0
    %336 = vmatprep.subr.bf16.mxu0 0
    %337 = vmatpush1.bf16.msra.mxu0 0
    %338 = vmatprep.subr.bf16.mxu0 0
    %339 = vmatpush1.bf16.msra.mxu0 0
    %340 = vmatprep.subr.bf16.mxu0 0
    %341 = vmatpush1.bf16.msra.mxu0 0
    %342 = vmatprep.mubr.bf16.mxu0 0
    %343 = vmatmul.mubr.bf16.gmra.mrb[0].mxu0 %v117
    %v344 = vpop.f32.mrb[0].mxu0
    %v345 = vadd.f32 0.0, %v344
    %v346 = vpop.f32.mrb[0].mxu0
    %v347 = vadd.f32 0.0, %v346
    %v348 = vpop.f32.mrb[0].mxu0
    %v349 = vpop.f32.mrb[0].mxu0
    %350 = vdwg.mxu0
    %351 = vmatprep.subr.bf16.mxu0 %v249
    %352 = vmatpush1.bf16.msra.mxu0 %v248
    %353 = vmatprep.subr.bf16.mxu0 %v253
    %354 = vmatpush1.bf16.msra.mxu0 %v252
    %355 = vmatprep.subr.bf16.mxu0 %v257
    %356 = vmatpush1.bf16.msra.mxu0 %v256
    %357 = vmatprep.subr.bf16.mxu0 %v261
    %358 = vmatpush1.bf16.msra.mxu0 %v260
    %359 = vmatprep.subr.bf16.mxu0 %v265
    %360 = vmatpush1.bf16.msra.mxu0 %v264
    %361 = vmatprep.subr.bf16.mxu0 %v269
    %362 = vmatpush1.bf16.msra.mxu0 %v268
    %363 = vmatprep.subr.bf16.mxu0 %v273
    %364 = vmatpush1.bf16.msra.mxu0 %v272
    %365 = vmatprep.subr.bf16.mxu0 %v277
    %366 = vmatpush1.bf16.msra.mxu0 %v276
    %367 = vmatprep.subr.bf16.mxu0 0
    %368 = vmatpush1.bf16.msra.mxu0 0
    %369 = vmatprep.subr.bf16.mxu0 0
    %370 = vmatpush1.bf16.msra.mxu0 0
    %371 = vmatprep.subr.bf16.mxu0 0
    %372 = vmatpush1.bf16.msra.mxu0 0
    %373 = vmatprep.subr.bf16.mxu0 0
    %374 = vmatpush1.bf16.msra.mxu0 0
    %375 = vmatprep.subr.bf16.mxu0 0
    %376 = vmatpush1.bf16.msra.mxu0 0
    %377 = vmatprep.subr.bf16.mxu0 0
    %378 = vmatpush1.bf16.msra.mxu0 0
    %379 = vmatprep.subr.bf16.mxu0 0
    %380 = vmatpush1.bf16.msra.mxu0 0
    %381 = vmatprep.subr.bf16.mxu0 0
    %382 = vmatpush1.bf16.msra.mxu0 0
    %383 = vmatprep.mubr.bf16.mxu0 0
    %384 = vmatmul.mubr.bf16.gmra.mrb[0].mxu0 %v117
    %v385 = vpop.f32.mrb[0].mxu0
    %v386 = vadd.f32 0.0, %v385
    %v387 = vpop.f32.mrb[0].mxu0
    %v388 = vadd.f32 0.0, %v387
    %v389 = vpop.f32.mrb[0].mxu0
    %v390 = vpop.f32.mrb[0].mxu0
    %391 = vdwg.mxu0
    %v424 = vunpack.c.l.b16 %v85
    %v425 = vunpack.c.h.b16 %v85
    %v426 = vunpack.c.l.b16 %v86
    %v427 = vunpack.c.h.b16 %v86
    %v428 = vunpack.c.l.b16 %v87
    %v429 = vunpack.c.h.b16 %v87
    %v430 = vunpack.c.l.b16 %v88
    %v431 = vunpack.c.h.b16 %v88
    %v432 = vunpack.c.l.b16 %v89
    %v433 = vunpack.c.h.b16 %v89
    %v434 = vunpack.c.l.b16 %v90
    %v435 = vunpack.c.h.b16 %v90
    %v436 = vunpack.c.l.b16 %v91
    %v437 = vunpack.c.h.b16 %v91
    %v438 = vunpack.c.l.b16 %v92
    %v439 = vunpack.c.h.b16 %v92
    %v440 = vunpack.c.l.b16 %v93
    %v441 = vunpack.c.h.b16 %v93
    %v442 = vunpack.c.l.b16 %v94
    %v443 = vunpack.c.h.b16 %v94
    %v444 = vunpack.c.l.b16 %v95
    %v445 = vunpack.c.h.b16 %v95
    %v446 = vunpack.c.l.b16 %v96
    %v447 = vunpack.c.h.b16 %v96
    %v448 = vunpack.c.l.b16 %v97
    %v449 = vunpack.c.h.b16 %v97
    %v450 = vunpack.c.l.b16 %v98
    %v451 = vunpack.c.h.b16 %v98
    %v452 = vunpack.c.l.b16 %v99
    %v453 = vunpack.c.h.b16 %v99
    %v454 = vunpack.c.l.b16 %v100
    %v455 = vunpack.c.h.b16 %v100
    %v456 = vunpack.c.l.b16 %v101
    %v457 = vunpack.c.h.b16 %v101
    %v458 = vunpack.c.l.b16 %v102
    %v459 = vunpack.c.h.b16 %v102
    %v460 = vunpack.c.l.b16 %v103
    %v461 = vunpack.c.h.b16 %v103
    %v462 = vunpack.c.l.b16 %v104
    %v463 = vunpack.c.h.b16 %v104
    %v464 = vunpack.c.l.b16 %v105
    %v465 = vunpack.c.h.b16 %v105
    %v466 = vunpack.c.l.b16 %v106
    %v467 = vunpack.c.h.b16 %v106
    %v468 = vunpack.c.l.b16 %v107
    %v469 = vunpack.c.h.b16 %v107
    %v470 = vunpack.c.l.b16 %v108
    %v471 = vunpack.c.h.b16 %v108
    %v472 = vunpack.c.l.b16 %v109
    %v473 = vunpack.c.h.b16 %v109
    %v474 = vunpack.c.l.b16 %v110
    %v475 = vunpack.c.h.b16 %v110
    %v476 = vunpack.c.l.b16 %v111
    %v477 = vunpack.c.h.b16 %v111
    %v478 = vunpack.c.l.b16 %v112
    %v479 = vunpack.c.h.b16 %v112
    %v480 = vunpack.c.l.b16 %v113
    %v481 = vunpack.c.h.b16 %v113
    %v482 = vunpack.c.l.b16 %v114
    %v483 = vunpack.c.h.b16 %v114
    %v484 = vunpack.c.l.b16 %v115
    %v485 = vunpack.c.h.b16 %v115
    %v486 = vunpack.c.l.b16 %v116
    %v487 = vunpack.c.h.b16 %v116
    %v488 = vpack.c.b16 %v428, %v424
    %v489 = vpack.c.b16 %v429, %v425
    %v490 = vpack.c.b16 %v430, %v426
    %v491 = vpack.c.b16 %v431, %v427
    %v492 = vpack.c.b16 %v436, %v432
    %v493 = vpack.c.b16 %v437, %v433
    %v494 = vpack.c.b16 %v438, %v434
    %v495 = vpack.c.b16 %v439, %v435
    %v496 = vpack.c.b16 %v444, %v440
    %v497 = vpack.c.b16 %v445, %v441
    %v498 = vpack.c.b16 %v446, %v442
    %v499 = vpack.c.b16 %v447, %v443
    %v500 = vpack.c.b16 %v452, %v448
    %v501 = vpack.c.b16 %v453, %v449
    %v502 = vpack.c.b16 %v454, %v450
    %v503 = vpack.c.b16 %v455, %v451
    %v504 = vpack.c.b16 %v460, %v456
    %v505 = vpack.c.b16 %v461, %v457
    %v506 = vpack.c.b16 %v462, %v458
    %v507 = vpack.c.b16 %v463, %v459
    %v508 = vpack.c.b16 %v468, %v464
    %v509 = vpack.c.b16 %v469, %v465
    %v510 = vpack.c.b16 %v470, %v466
    %v511 = vpack.c.b16 %v471, %v467
    %v512 = vpack.c.b16 %v476, %v472
    %v513 = vpack.c.b16 %v477, %v473
    %v514 = vpack.c.b16 %v478, %v474
    %v515 = vpack.c.b16 %v479, %v475
    %v516 = vpack.c.b16 %v484, %v480
    %v517 = vpack.c.b16 %v485, %v481
    %v518 = vpack.c.b16 %v486, %v482
    %v519 = vpack.c.b16 %v487, %v483
    %552 = vmatprep.subr.bf16.mxu0 %v489
    %553 = vmatpush1.bf16.msra.mxu0 %v488
    %554 = vmatprep.subr.bf16.mxu0 %v493
    %555 = vmatpush1.bf16.msra.mxu0 %v492
    %556 = vmatprep.subr.bf16.mxu0 %v497
    %557 = vmatpush1.bf16.msra.mxu0 %v496
    %558 = vmatprep.subr.bf16.mxu0 %v501
    %559 = vmatpush1.bf16.msra.mxu0 %v500
    %560 = vmatprep.subr.bf16.mxu0 %v505
    %561 = vmatpush1.bf16.msra.mxu0 %v504
    %562 = vmatprep.subr.bf16.mxu0 %v509
    %563 = vmatpush1.bf16.msra.mxu0 %v508
    %564 = vmatprep.subr.bf16.mxu0 %v513
    %565 = vmatpush1.bf16.msra.mxu0 %v512
    %566 = vmatprep.subr.bf16.mxu0 %v517
    %567 = vmatpush1.bf16.msra.mxu0 %v516
    %568 = vmatprep.subr.bf16.mxu0 0
    %569 = vmatpush1.bf16.msra.mxu0 0
    %570 = vmatprep.subr.bf16.mxu0 0
    %571 = vmatpush1.bf16.msra.mxu0 0
    %572 = vmatprep.subr.bf16.mxu0 0
    %573 = vmatpush1.bf16.msra.mxu0 0
    %574 = vmatprep.subr.bf16.mxu0 0
    %575 = vmatpush1.bf16.msra.mxu0 0
    %576 = vmatprep.subr.bf16.mxu0 0
    %577 = vmatpush1.bf16.msra.mxu0 0
    %578 = vmatprep.subr.bf16.mxu0 0
    %579 = vmatpush1.bf16.msra.mxu0 0
    %580 = vmatprep.subr.bf16.mxu0 0
    %581 = vmatpush1.bf16.msra.mxu0 0
    %582 = vmatprep.subr.bf16.mxu0 0
    %583 = vmatpush1.bf16.msra.mxu0 0
    %584 = vmatprep.mubr.bf16.mxu0 0
    %585 = vmatmul.mubr.bf16.gmra.mrb[0].mxu0 %v84
    %v586 = vpop.f32.mrb[0].mxu0
    %v587 = vadd.f32 %v345, %v586
    %v588 = vpop.f32.mrb[0].mxu0
    %v589 = vadd.f32 %v347, %v588
    %v590 = vpop.f32.mrb[0].mxu0
    %v591 = vpop.f32.mrb[0].mxu0
    %592 = vdwg.mxu0
    %593 = vmatprep.subr.bf16.mxu0 %v491
    %594 = vmatpush1.bf16.msra.mxu0 %v490
    %595 = vmatprep.subr.bf16.mxu0 %v495
    %596 = vmatpush1.bf16.msra.mxu0 %v494
    %597 = vmatprep.subr.bf16.mxu0 %v499
    %598 = vmatpush1.bf16.msra.mxu0 %v498
    %599 = vmatprep.subr.bf16.mxu0 %v503
    %600 = vmatpush1.bf16.msra.mxu0 %v502
    %601 = vmatprep.subr.bf16.mxu0 %v507
    %602 = vmatpush1.bf16.msra.mxu0 %v506
    %603 = vmatprep.subr.bf16.mxu0 %v511
    %604 = vmatpush1.bf16.msra.mxu0 %v510
    %605 = vmatprep.subr.bf16.mxu0 %v515
    %606 = vmatpush1.bf16.msra.mxu0 %v514
    %607 = vmatprep.subr.bf16.mxu0 %v519
    %608 = vmatpush1.bf16.msra.mxu0 %v518
    %609 = vmatprep.subr.bf16.mxu0 0
    %610 = vmatpush1.bf16.msra.mxu0 0
    %611 = vmatprep.subr.bf16.mxu0 0
    %612 = vmatpush1.bf16.msra.mxu0 0
    %613 = vmatprep.subr.bf16.mxu0 0
    %614 = vmatpush1.bf16.msra.mxu0 0
    %615 = vmatprep.subr.bf16.mxu0 0
    %616 = vmatpush1.bf16.msra.mxu0 0
    %617 = vmatprep.subr.bf16.mxu0 0
    %618 = vmatpush1.bf16.msra.mxu0 0
    %619 = vmatprep.subr.bf16.mxu0 0
    %620 = vmatpush1.bf16.msra.mxu0 0
    %621 = vmatprep.subr.bf16.mxu0 0
    %622 = vmatpush1.bf16.msra.mxu0 0
    %623 = vmatprep.subr.bf16.mxu0 0
    %624 = vmatpush1.bf16.msra.mxu0 0
    %625 = vmatprep.mubr.bf16.mxu0 0
    %626 = vmatmul.mubr.bf16.gmra.mrb[0].mxu0 %v84
    %v627 = vpop.f32.mrb[0].mxu0
    %v628 = vadd.f32 %v386, %v627
    %v629 = vpop.f32.mrb[0].mxu0
    %v630 = vadd.f32 %v388, %v629
    %v631 = vpop.f32.mrb[0].mxu0
    %v632 = vpop.f32.mrb[0].mxu0
    %633 = vdwg.mxu0
    %v634 = vld [vmem:[%s4] sm:$0xf]
    %v636 = vlaneseq
    %v637 = vshrl.u32 %v636, 7
    %v638 = vsub.s32 0, %v637
    %v639 = vrot.slane %v634, %v638
    %v640 = vlaneseq
    %v641 = vshrl.u32 %v640, 7
    %v642 = vsub.s32 1, %v641
    %v643 = vrot.slane %v634, %v642
    %v644 = vlaneseq
    %v645 = vshrl.u32 %v644, 7
    %v646 = vsub.s32 2, %v645
    %v647 = vrot.slane %v634, %v646
    %v648 = vlaneseq
    %v649 = vshrl.u32 %v648, 7
    %v650 = vsub.s32 3, %v649
    %v651 = vrot.slane %v634, %v650
    %v656 = vadd.f32 %v587, %v639
    %v657 = vadd.f32 %v589, %v643
    %v658 = vadd.f32 %v628, %v647
    %v659 = vadd.f32 %v630, %v651
    %v660 = vmax.f32 %v656, 0.0
    %v661 = vmax.f32 %v657, 0.0
    %v662 = vmax.f32 %v658, 0.0
    %v663 = vmax.f32 %v659, 0.0
    %v664 = vpack.c.bf16 %v660, %v660
    %v665 = vpack.c.bf16 %v661, %v661
    %v666 = vpack.c.bf16 %v662, %v662
    %v667 = vpack.c.bf16 %v663, %v663
    %v668 = vld [vmem:[#allocation9] sm:$0xf]
    %v669 = vld [vmem:[#allocation9 + $0x4] sm:$0xf]
    %v670 = vld [vmem:[#allocation9 + $0x8] sm:$0xf]
    %v671 = vld [vmem:[#allocation9 + $0xc] sm:$0xf]
    %v672 = vld [vmem:[#allocation9 + $0x10] sm:$0xf]
    %v673 = vld [vmem:[#allocation9 + $0x14] sm:$0xf]
    %v674 = vld [vmem:[#allocation9 + $0x18] sm:$0xf]
    %v675 = vld [vmem:[#allocation9 + $0x1c] sm:$0xf]
    %v676 = vld [vmem:[#allocation9 + $0x20] sm:$0xf]
    %v677 = vld [vmem:[#allocation9 + $0x24] sm:$0xf]
    %v678 = vld [vmem:[#allocation9 + $0x28] sm:$0xf]
    %v679 = vld [vmem:[#allocation9 + $0x2c] sm:$0xf]
    %v680 = vld [vmem:[#allocation9 + $0x30] sm:$0xf]
    %v681 = vld [vmem:[#allocation9 + $0x34] sm:$0xf]
    %v682 = vld [vmem:[#allocation9 + $0x38] sm:$0xf]
    %v683 = vld [vmem:[#allocation9 + $0x3c] sm:$0xf]
    %v684 = vld [vmem:[#allocation9 + $0x40] sm:$0xf]
    %v685 = vld [vmem:[#allocation9 + $0x44] sm:$0xf]
    %v686 = vld [vmem:[#allocation9 + $0x48] sm:$0xf]
    %v687 = vld [vmem:[#allocation9 + $0x4c] sm:$0xf]
    %v688 = vld [vmem:[#allocation9 + $0x50] sm:$0xf]
    %v689 = vld [vmem:[#allocation9 + $0x54] sm:$0xf]
    %v690 = vld [vmem:[#allocation9 + $0x58] sm:$0xf]
    %v691 = vld [vmem:[#allocation9 + $0x5c] sm:$0xf]
    %v692 = vld [vmem:[#allocation9 + $0x60] sm:$0xf]
    %v693 = vld [vmem:[#allocation9 + $0x64] sm:$0xf]
    %v694 = vld [vmem:[#allocation9 + $0x68] sm:$0xf]
    %v695 = vld [vmem:[#allocation9 + $0x6c] sm:$0xf]
    %v696 = vld [vmem:[#allocation9 + $0x70] sm:$0xf]
    %v697 = vld [vmem:[#allocation9 + $0x74] sm:$0xf]
    %v698 = vld [vmem:[#allocation9 + $0x78] sm:$0xf]
    %v699 = vld [vmem:[#allocation9 + $0x7c] sm:$0xf]
    %v700 = vld [vmem:[#allocation9 + $0x80] sm:$0xf]
    %v701 = vld [vmem:[#allocation9 + $0x84] sm:$0xf]
    %v702 = vld [vmem:[#allocation9 + $0x88] sm:$0xf]
    %v703 = vld [vmem:[#allocation9 + $0x8c] sm:$0xf]
    %v704 = vld [vmem:[#allocation9 + $0x90] sm:$0xf]
    %v705 = vld [vmem:[#allocation9 + $0x94] sm:$0xf]
    %v706 = vld [vmem:[#allocation9 + $0x98] sm:$0xf]
    %v707 = vld [vmem:[#allocation9 + $0x9c] sm:$0xf]
    %v708 = vld [vmem:[#allocation9 + $0xa0] sm:$0xf]
    %v709 = vld [vmem:[#allocation9 + $0xa4] sm:$0xf]
    %v710 = vld [vmem:[#allocation9 + $0xa8] sm:$0xf]
    %v711 = vld [vmem:[#allocation9 + $0xac] sm:$0xf]
    %v712 = vld [vmem:[#allocation9 + $0xb0] sm:$0xf]
    %v713 = vld [vmem:[#allocation9 + $0xb4] sm:$0xf]
    %v714 = vld [vmem:[#allocation9 + $0xb8] sm:$0xf]
    %v715 = vld [vmem:[#allocation9 + $0xbc] sm:$0xf]
    %v716 = vld [vmem:[#allocation9 + $0xc0] sm:$0xf]
    %v717 = vld [vmem:[#allocation9 + $0xc4] sm:$0xf]
    %v718 = vld [vmem:[#allocation9 + $0xc8] sm:$0xf]
    %v719 = vld [vmem:[#allocation9 + $0xcc] sm:$0xf]
    %v720 = vld [vmem:[#allocation9 + $0xd0] sm:$0xf]
    %v721 = vld [vmem:[#allocation9 + $0xd4] sm:$0xf]
    %v722 = vld [vmem:[#allocation9 + $0xd8] sm:$0xf]
    %v723 = vld [vmem:[#allocation9 + $0xdc] sm:$0xf]
    %v724 = vld [vmem:[#allocation9 + $0xe0] sm:$0xf]
    %v725 = vld [vmem:[#allocation9 + $0xe4] sm:$0xf]
    %v726 = vld [vmem:[#allocation9 + $0xe8] sm:$0xf]
    %v727 = vld [vmem:[#allocation9 + $0xec] sm:$0xf]
    %v728 = vld [vmem:[#allocation9 + $0xf0] sm:$0xf]
    %v729 = vld [vmem:[#allocation9 + $0xf4] sm:$0xf]
    %v730 = vld [vmem:[#allocation9 + $0xf8] sm:$0xf]
    %v731 = vld [vmem:[#allocation9 + $0xfc] sm:$0xf]
    %s732 = sld [smem:[#allocation2]]
    %v733 = vstv %s732
    %v798 = vunpack.c.l.b16 %v668
    %v799 = vunpack.c.l.b16 %v669
    %v800 = vunpack.c.l.b16 %v670
    %v801 = vunpack.c.l.b16 %v671
    %v802 = vunpack.c.l.b16 %v672
    %v803 = vunpack.c.l.b16 %v673
    %v804 = vunpack.c.l.b16 %v674
    %v805 = vunpack.c.l.b16 %v675
    %v806 = vunpack.c.l.b16 %v676
    %v807 = vunpack.c.l.b16 %v677
    %v808 = vunpack.c.l.b16 %v678
    %v809 = vunpack.c.l.b16 %v679
    %v810 = vunpack.c.l.b16 %v680
    %v811 = vunpack.c.l.b16 %v681
    %v812 = vunpack.c.l.b16 %v682
    %v813 = vunpack.c.l.b16 %v683
    %v814 = vunpack.c.l.b16 %v684
    %v815 = vunpack.c.l.b16 %v685
    %v816 = vunpack.c.l.b16 %v686
    %v817 = vunpack.c.l.b16 %v687
    %v818 = vunpack.c.l.b16 %v688
    %v819 = vunpack.c.l.b16 %v689
    %v820 = vunpack.c.l.b16 %v690
    %v821 = vunpack.c.l.b16 %v691
    %v822 = vunpack.c.l.b16 %v692
    %v823 = vunpack.c.l.b16 %v693
    %v824 = vunpack.c.l.b16 %v694
    %v825 = vunpack.c.l.b16 %v695
    %v826 = vunpack.c.l.b16 %v696
    %v827 = vunpack.c.l.b16 %v697
    %v828 = vunpack.c.l.b16 %v698
    %v829 = vunpack.c.l.b16 %v699
    %v830 = vunpack.c.l.b16 %v700
    %v831 = vunpack.c.l.b16 %v701
    %v832 = vunpack.c.l.b16 %v702
    %v833 = vunpack.c.l.b16 %v703
    %v834 = vunpack.c.l.b16 %v704
    %v835 = vunpack.c.l.b16 %v705
    %v836 = vunpack.c.l.b16 %v706
    %v837 = vunpack.c.l.b16 %v707
    %v838 = vunpack.c.l.b16 %v708
    %v839 = vunpack.c.l.b16 %v709
    %v840 = vunpack.c.l.b16 %v710
    %v841 = vunpack.c.l.b16 %v711
    %v842 = vunpack.c.l.b16 %v712
    %v843 = vunpack.c.l.b16 %v713
    %v844 = vunpack.c.l.b16 %v714
    %v845 = vunpack.c.l.b16 %v715
    %v846 = vunpack.c.l.b16 %v716
    %v847 = vunpack.c.l.b16 %v717
    %v848 = vunpack.c.l.b16 %v718
    %v849 = vunpack.c.l.b16 %v719
    %v850 = vunpack.c.l.b16 %v720
    %v851 = vunpack.c.l.b16 %v721
    %v852 = vunpack.c.l.b16 %v722
    %v853 = vunpack.c.l.b16 %v723
    %v854 = vunpack.c.l.b16 %v724
    %v855 = vunpack.c.l.b16 %v725
    %v856 = vunpack.c.l.b16 %v726
    %v857 = vunpack.c.l.b16 %v727
    %v858 = vunpack.c.l.b16 %v728
    %v859 = vunpack.c.l.b16 %v729
    %v860 = vunpack.c.l.b16 %v730
    %v861 = vunpack.c.l.b16 %v731
    %v862 = vpack.c.b16 %v799, %v798
    %v863 = vpack.c.b16 %v801, %v800
    %v864 = vpack.c.b16 %v803, %v802
    %v865 = vpack.c.b16 %v805, %v804
    %v866 = vpack.c.b16 %v807, %v806
    %v867 = vpack.c.b16 %v809, %v808
    %v868 = vpack.c.b16 %v811, %v810
    %v869 = vpack.c.b16 %v813, %v812
    %v870 = vpack.c.b16 %v815, %v814
    %v871 = vpack.c.b16 %v817, %v816
    %v872 = vpack.c.b16 %v819, %v818
    %v873 = vpack.c.b16 %v821, %v820
    %v874 = vpack.c.b16 %v823, %v822
    %v875 = vpack.c.b16 %v825, %v824
    %v876 = vpack.c.b16 %v827, %v826
    %v877 = vpack.c.b16 %v829, %v828
    %v878 = vpack.c.b16 %v831, %v830
    %v879 = vpack.c.b16 %v833, %v832
    %v880 = vpack.c.b16 %v835, %v834
    %v881 = vpack.c.b16 %v837, %v836
    %v882 = vpack.c.b16 %v839, %v838
    %v883 = vpack.c.b16 %v841, %v840
    %v884 = vpack.c.b16 %v843, %v842
    %v885 = vpack.c.b16 %v845, %v844
    %v886 = vpack.c.b16 %v847, %v846
    %v887 = vpack.c.b16 %v849, %v848
    %v888 = vpack.c.b16 %v851, %v850
    %v889 = vpack.c.b16 %v853, %v852
    %v890 = vpack.c.b16 %v855, %v854
    %v891 = vpack.c.b16 %v857, %v856
    %v892 = vpack.c.b16 %v859, %v858
    %v893 = vpack.c.b16 %v861, %v860
    %926 = vmatprep.subr.bf16.mxu0 0
    %927 = vmatpush1.bf16.msra.mxu0 %v862
    %928 = vmatprep.subr.bf16.mxu0 0
    %929 = vmatpush1.bf16.msra.mxu0 %v863
    %930 = vmatprep.subr.bf16.mxu0 0
    %931 = vmatpush1.bf16.msra.mxu0 %v864
    %932 = vmatprep.subr.bf16.mxu0 0
    %933 = vmatpush1.bf16.msra.mxu0 %v865
    %934 = vmatprep.subr.bf16.mxu0 0
    %935 = vmatpush1.bf16.msra.mxu0 %v866
    %936 = vmatprep.subr.bf16.mxu0 0
    %937 = vmatpush1.bf16.msra.mxu0 %v867
    %938 = vmatprep.subr.bf16.mxu0 0
    %939 = vmatpush1.bf16.msra.mxu0 %v868
    %940 = vmatprep.subr.bf16.mxu0 0
    %941 = vmatpush1.bf16.msra.mxu0 %v869
    %942 = vmatprep.subr.bf16.mxu0 0
    %943 = vmatpush1.bf16.msra.mxu0 %v870
    %944 = vmatprep.subr.bf16.mxu0 0
    %945 = vmatpush1.bf16.msra.mxu0 %v871
    %946 = vmatprep.subr.bf16.mxu0 0
    %947 = vmatpush1.bf16.msra.mxu0 %v872
    %948 = vmatprep.subr.bf16.mxu0 0
    %949 = vmatpush1.bf16.msra.mxu0 %v873
    %950 = vmatprep.subr.bf16.mxu0 0
    %951 = vmatpush1.bf16.msra.mxu0 %v874
    %952 = vmatprep.subr.bf16.mxu0 0
    %953 = vmatpush1.bf16.msra.mxu0 %v875
    %954 = vmatprep.subr.bf16.mxu0 0
    %955 = vmatpush1.bf16.msra.mxu0 %v876
    %956 = vmatprep.subr.bf16.mxu0 0
    %957 = vmatpush1.bf16.msra.mxu0 %v877
    %958 = vmatprep.mubr.bf16.mxu0 %v665
    %959 = vmatmul.mubr.bf16.gmra.mrb[0].mxu0 %v664
    %v960 = vpop.f32.mrb[0].mxu0
    %v961 = vadd.f32 %v733, %v960
    %v962 = vpop.f32.mrb[0].mxu0
    %v963 = vpop.f32.mrb[0].mxu0
    %v964 = vpop.f32.mrb[0].mxu0
    %965 = vdwg.mxu0
    %966 = vmatprep.subr.bf16.mxu0 0
    %967 = vmatpush1.bf16.msra.mxu0 %v878
    %968 = vmatprep.subr.bf16.mxu0 0
    %969 = vmatpush1.bf16.msra.mxu0 %v879
    %970 = vmatprep.subr.bf16.mxu0 0
    %971 = vmatpush1.bf16.msra.mxu0 %v880
    %972 = vmatprep.subr.bf16.mxu0 0
    %973 = vmatpush1.bf16.msra.mxu0 %v881
    %974 = vmatprep.subr.bf16.mxu0 0
    %975 = vmatpush1.bf16.msra.mxu0 %v882
    %976 = vmatprep.subr.bf16.mxu0 0
    %977 = vmatpush1.bf16.msra.mxu0 %v883
    %978 = vmatprep.subr.bf16.mxu0 0
    %979 = vmatpush1.bf16.msra.mxu0 %v884
    %980 = vmatprep.subr.bf16.mxu0 0
    %981 = vmatpush1.bf16.msra.mxu0 %v885
    %982 = vmatprep.subr.bf16.mxu0 0
    %983 = vmatpush1.bf16.msra.mxu0 %v886
    %984 = vmatprep.subr.bf16.mxu0 0
    %985 = vmatpush1.bf16.msra.mxu0 %v887
    %986 = vmatprep.subr.bf16.mxu0 0
    %987 = vmatpush1.bf16.msra.mxu0 %v888
    %988 = vmatprep.subr.bf16.mxu0 0
    %989 = vmatpush1.bf16.msra.mxu0 %v889
    %990 = vmatprep.subr.bf16.mxu0 0
    %991 = vmatpush1.bf16.msra.mxu0 %v890
    %992 = vmatprep.subr.bf16.mxu0 0
    %993 = vmatpush1.bf16.msra.mxu0 %v891
    %994 = vmatprep.subr.bf16.mxu0 0
    %995 = vmatpush1.bf16.msra.mxu0 %v892
    %996 = vmatprep.subr.bf16.mxu0 0
    %997 = vmatpush1.bf16.msra.mxu0 %v893
    %998 = vmatprep.mubr.bf16.mxu0 %v667
    %999 = vmatmul.mubr.bf16.gmra.mrb[0].mxu0 %v666
    %v1000 = vpop.f32.mrb[0].mxu0
    %v1001 = vadd.f32 %v961, %v1000
    %v1002 = vpop.f32.mrb[0].mxu0
    %v1003 = vpop.f32.mrb[0].mxu0
    %v1004 = vpop.f32.mrb[0].mxu0
    %1005 = vdwg.mxu0
    %v1006 = vxor.u32 %v1001, 2147483648
    %v1007 = vmul.f32 %v1006, 1.442695
    %v1008 = vpow.pop %v1007
    %v1009 = vadd.f32 %v1008, 1.0
    %v1010 = vrcp.pop %v1009
    %v1011 = vmul.f32 1.0, %v1010
    %v1012 = vsub.f32 %v82, %v83
    %v1013 = vmul.f32 %v1011, %v1012
    %v1014 = vadd.f32 %v83, %v1013
    %1015 = vst [vmem:[#allocation11] sm:$0xf] %v1014
    // Predicated region
    $region46: #{tpu_custom_call.1} parent=1 // pred_check
      _
    $region47: #{tpu_custom_call.1} parent=1 // pred_check_branch
      %1017 = sbr.rel (0) target = $region49
    $region48: #{tpu_custom_call.1} parent=1 // pred_region
      %s1019 = ssub.s32 64, 64
      %1020 = vsyncadd [#allocation5], %s1019
      %s1022 = sshll.u32 [#allocation11], 4
      %s1023 = int_to_ptr.vmem [resolvable:$true] %s1022
      %1025 = dma.vmem_to_hbm [thread:$0]  %s1023, 64, %s7, [#allocation5]
    $region49: #{tpu_custom_call.1} parent=1 // pred_fallthru
      _
    // Predicated region
    $region50: #{tpu_custom_call.1} parent=1 // pred_check
      _
    $region51: #{tpu_custom_call.1} parent=1 // pred_check_branch
      %1027 = sbr.rel (0) target = $region53
    $region52: #{tpu_custom_call.1} parent=1 // pred_region
      %1028 = dma.done [#allocation5], 64
    $region53: #{tpu_custom_call.1} parent=1 // pred_fallthru
      _
    %1029 = vsyncpa [#allocation4], 1
    %1030 = vsyncpa [#allocation7], 1
    %1031 = vsyncpa [#allocation10], 1
    %1032 = vsyncpa [#allocation5], 1

</llo_original>
